<compile_context>
chip_gen: v7x
topology: tpu7x:2x2x1
jax: 0.10.0
libtpu: 0.0.40
codegen_flags: <defaults>
</compile_context>

<pallas_src>
import numpy as np
import jax
import jax.numpy as jnp
from jax import lax
from jax.experimental import pallas as pl
from jax.experimental.pallas import tpu as pltpu


def _build_haar_weights(channel_in: int) -> jnp.ndarray:
    """Deterministic Haar weights, identical to the PyTorch module __init__."""
    w = np.ones((4, 1, 2, 2), dtype=np.float32)
    w[1, 0, 0, 1] = -1.0
    w[1, 0, 1, 1] = -1.0
    w[2, 0, 1, 0] = -1.0
    w[2, 0, 1, 1] = -1.0
    w[3, 0, 1, 0] = -1.0
    w[3, 0, 0, 1] = -1.0
    w = np.concatenate([w] * channel_in, axis=0)  # (4*C, 1, 2, 2)
    return jnp.asarray(w)


def _build_col_matrix(wt: int, dtype) -> jnp.ndarray:
    """(wt, wt) constant for the horizontal pair-combine, with the 1/4 folded in.

    For a row v of length wt:  (v @ M)[j]       = 0.25*(v[2j] + v[2j+1])
                               (v @ M)[wt//2+j] = 0.25*(v[2j] - v[2j+1])
    """
    w2 = wt // 2
    m = np.zeros((wt, wt), dtype=np.float32)
    j = np.arange(w2)
    m[2 * j, j] = 1.0
    m[2 * j + 1, j] = 1.0
    m[2 * j, w2 + j] = 1.0
    m[2 * j + 1, w2 + j] = -1.0
    return jnp.asarray(m * 0.25, dtype=dtype)


def _butterfly_store(r0, r1, mc_ref, o_ref):
    """r0/r1: (Rb, Wt) even/odd spatial rows.  Writes the 4 Haar sub-bands.

    Sign mapping (matches the PyTorch haar_weights exactly):
      band0 = a+b+c+d   band1 = a-b+c-d   band2 = a+b-c-d   band3 = a-b-c+d
    with a,b on the even row and c,d on the odd row of each 2x2 window.
    """
    w2 = o_ref.shape[3]
    s = r0 + r1                          # vertical sum   (VPU)
    d = r0 - r1                          # vertical diff  (VPU)
    ys = jnp.dot(s, mc_ref[...], preferred_element_type=jnp.float32)  # [band0|band1]
    yd = jnp.dot(d, mc_ref[...], preferred_element_type=jnp.float32)  # [band2|band3]
    o_ref[0, 0] = ys[:, :w2].astype(o_ref.dtype)
    o_ref[0, 1] = ys[:, w2:].astype(o_ref.dtype)
    o_ref[0, 2] = yd[:, :w2].astype(o_ref.dtype)
    o_ref[0, 3] = yd[:, w2:].astype(o_ref.dtype)


def _haar_tiled_kernel(xe_ref, xo_ref, mc_ref, o_ref):
    # xe/xo: (1, Rb, Wt) even/odd rows; mc: (Wt, Wt); o: (1, 4, Rb, Wt//2)
    _butterfly_store(xe_ref[0], xo_ref[0], mc_ref, o_ref)


def _haar_full_kernel(x_ref, mc_ref, o_ref):
    # x: (1, Rb, 2W) packed [even | odd]; mc: (W, W); o: (1, 4, Rb, W//2)
    w = mc_ref.shape[0]
    x = x_ref[0]
    _butterfly_store(x[:, :w], x[:, w:], mc_ref, o_ref)


def haar_downsampling(x: jnp.ndarray, *, block_target_bytes: int = 2 << 20) -> jnp.ndarray:
    """Forward pass (rev=False) of HaarDownsampling. x: (B, C, H, W) NCHW."""
    B, C, H, W = x.shape
    assert H % 2 == 0 and W % 2 == 0, "H and W must be even"
    H2, W2 = H // 2, W // 2
    R = C * H2                                   # merged (channel, out-row) axis
    itemsize = np.dtype(x.dtype).itemsize

    # Free reshape: each row packs one spatial row-pair as [even(W) | odd(W)].
    x2 = x.reshape(B, R, 2 * W)

    tiled = (W % 256 == 0)
    Wt = 256 if tiled else W                     # per-step horizontal extent
    w2t = Wt // 2
    n_w = W // Wt

    # Row blocking: ~block_target_bytes of input per grid step (output is the
    # same size), amortizing per-step overhead while keeping the
    # double-buffered footprint well under every generation's VMEM.
    rb = max(8, int(block_target_bytes // (2 * Wt * itemsize)))
    rb = max(8, (rb // 8) * 8)                   # sublane-aligned block rows
    if rb >= R:
        rb, n_r = R, 1
    else:
        n_r = pl.cdiv(R, rb)                     # ragged last block: row-local math => safe

    mc = _build_col_matrix(Wt, x.dtype)
    mc_bytes = Wt * Wt * itemsize

    flops = 4.0 * B * R * W * Wt + 4.0 * B * R * W          # MXU MACs + VPU add/sub
    bytes_accessed = 2 * B * R * 2 * W * itemsize + mc_bytes  # in + out + constant
    cost = pl.CostEstimate(flops=int(flops), transcendentals=0,
                           bytes_accessed=int(bytes_accessed))

    # Budget: double-buffered (in + out) blocks + the resident constant.
    block_bytes = 2 * rb * Wt * itemsize + 4 * rb * w2t * itemsize
    vmem_limit = int(min(64 << 20,
                         max(32 << 20, 3 * block_bytes + 2 * mc_bytes + (4 << 20))))

    out_shape = jax.ShapeDtypeStruct((B, 4, R, W2), x.dtype)

    if tiled:
        grid = (B, n_r, n_w)
        out4 = pl.pallas_call(
            _haar_tiled_kernel,
            out_shape=out_shape,
            grid_spec=pltpu.PrefetchScalarGridSpec(
                num_scalar_prefetch=0,
                grid=grid,
                in_specs=[
                    # even spatial rows: lanes [w*Wt, w*Wt + Wt)
                    pl.BlockSpec((1, rb, Wt), lambda b, r, w: (b, r, w)),
                    # odd spatial rows:  lanes [W + w*Wt, W + w*Wt + Wt)
                    pl.BlockSpec((1, rb, Wt), lambda b, r, w: (b, r, w + n_w)),
                    # constant column-combine matrix (same block every step -> resident)
                    pl.BlockSpec((Wt, Wt), lambda b, r, w: (0, 0)),
                ],
                out_specs=pl.BlockSpec((1, 4, rb, w2t), lambda b, r, w: (b, 0, r, w)),
            ),
            compiler_params=pltpu.CompilerParams(
                dimension_semantics=("parallel", "parallel", "parallel"),
                vmem_limit_bytes=vmem_limit,
            ),
            cost_estimate=cost,
        )(x2, x2, mc)
    else:
        # Small / awkward W: single full-width block (block dims == array dims).
        # TODO(synk): very large W that is not a multiple of 256 keeps an O(W^2)
        # constant here; extend the tiled path with input-lane masking if needed.
        grid = (B, n_r)
        out4 = pl.pallas_call(
            _haar_full_kernel,
            out_shape=out_shape,
            grid_spec=pltpu.PrefetchScalarGridSpec(
                num_scalar_prefetch=0,
                grid=grid,
                in_specs=[
                    pl.BlockSpec((1, rb, 2 * W), lambda b, r: (b, r, 0)),
                    pl.BlockSpec((W, W), lambda b, r: (0, 0)),
                ],
                out_specs=pl.BlockSpec((1, 4, rb, W2), lambda b, r: (b, 0, r, 0)),
            ),
            compiler_params=pltpu.CompilerParams(
                dimension_semantics=("parallel", "parallel"),
                vmem_limit_bytes=vmem_limit,
            ),
            cost_estimate=cost,
        )(x2, mc)

    # (B, 4, C*H2, W2) -> (B, 4*C, H2, W2): channel = subband*C + c, identical
    # element order to PyTorch's reshape -> transpose(1, 2) -> reshape.
    return out4.reshape(B, 4 * C, H2, W2)


def haar_downsampling_ref(x: jnp.ndarray, haar_weights: jnp.ndarray) -> jnp.ndarray:
    """Pure-JAX reference replicating F.conv2d(groups=C, stride=2)/4 + reshuffle."""
    B, C, H, W = x.shape
    out = lax.conv_general_dilated(
        x,
        haar_weights,
        window_strides=(2, 2),
        padding="VALID",
        dimension_numbers=("NCHW", "OIHW", "NCHW"),
        feature_group_count=C,
    ) / 4.0
    out = out.reshape(B, C, 4, H // 2, W // 2)
    out = jnp.transpose(out, (0, 2, 1, 3, 4))
    return out.reshape(B, C * 4, H // 2, W // 2)


def _check(x, **kwargs):
    B, C, H, W = x.shape
    out = jax.block_until_ready(haar_downsampling(x, **kwargs))
    ref = jax.block_until_ready(haar_downsampling_ref(x, _build_haar_weights(C)))
    assert out.shape == (B, 4 * C, H // 2, W // 2), out.shape
    np.testing.assert_allclose(np.asarray(out), np.asarray(ref), rtol=1e-5, atol=1e-5)


if __name__ == "__main__":
    key = jax.random.PRNGKey(0)
    k0, k1, k2 = jax.random.split(key, 3)

    # Small shape (exercises the full-width fallback path).
    _check(jax.random.normal(k0, (2, 4, 16, 16), dtype=jnp.float32))

    # W % 256 == 0 (exercises the lane-dense W-tiled MXU path, odd channel count).
    _check(jax.random.normal(k1, (1, 3, 16, 256), dtype=jnp.float32))

    # Ragged row blocking (non-dividing merged-row block) on the tiled path.
    _check(jax.random.normal(k2, (1, 3, 10, 256), dtype=jnp.float32),
           block_target_bytes=16 * 1024)

    print("KERNEL_OK")
</pallas_src>

<mosaic_0001>
module attributes {stable_mosaic.version = 11 : i64} {
  func.func @_haar_full_kernel(%arg0: i32, %arg1: i32, %arg2: memref<1x32x32xf32, #tpu.memory_space<vmem>>, %arg3: memref<16x16xf32, #tpu.memory_space<vmem>>, %arg4: memref<1x4x32x8xf32, #tpu.memory_space<vmem>>) attributes {dimension_semantics = [#tpu.dimension_semantics<parallel>, #tpu.dimension_semantics<parallel>], iteration_bounds = array<i64: 2, 1>, scalar_prefetch = 0 : i64, scratch_operands = 0 : i64, tpu.core_type = #tpu.core_type<tc>, window_params = [{transform_indices = @transform_0, window_bounds = array<i64: 1, 32, 32>}, {pipeline_mode = #tpu.pipeline_mode<synchronous>, transform_indices = @transform_1, window_bounds = array<i64: 16, 16>}, {transform_indices = @transform_2, window_bounds = array<i64: 1, 4, 32, 8>}]} {
    %c0 = arith.constant 0 : index
    %c0_0 = arith.constant 0 : index
    %c0_1 = arith.constant 0 : index
    %0 = vector.load %arg2[%c0, %c0_0, %c0_1] : memref<1x32x32xf32, #tpu.memory_space<vmem>>, vector<1x32x32xf32>
    %1 = vector.shape_cast %0 : vector<1x32x32xf32> to vector<32x32xf32>
    %2 = vector.extract_strided_slice %1 {offsets = [0, 0], sizes = [32, 16], strides = [1, 1]} : vector<32x32xf32> to vector<32x16xf32>
    %3 = vector.extract_strided_slice %1 {offsets = [0, 16], sizes = [32, 16], strides = [1, 1]} : vector<32x32xf32> to vector<32x16xf32>
    %4 = arith.addf %2, %3 : vector<32x16xf32>
    %5 = arith.subf %2, %3 : vector<32x16xf32>
    %c0_2 = arith.constant 0 : index
    %c0_3 = arith.constant 0 : index
    %6 = vector.load %arg3[%c0_2, %c0_3] : memref<16x16xf32, #tpu.memory_space<vmem>>, vector<16x16xf32>
    %cst = arith.constant dense<0.000000e+00> : vector<32x16xf32>
    %7 = tpu.matmul %4, %6, %cst {dimension_numbers = #tpu.dot_dimension_numbers<[1], [0], [0], [1], [0, 0, 1, 1], [], []>} : vector<32x16xf32>, vector<16x16xf32>, vector<32x16xf32> -> vector<32x16xf32>
    %c0_4 = arith.constant 0 : index
    %c0_5 = arith.constant 0 : index
    %8 = vector.load %arg3[%c0_4, %c0_5] : memref<16x16xf32, #tpu.memory_space<vmem>>, vector<16x16xf32>
    %cst_6 = arith.constant dense<0.000000e+00> : vector<32x16xf32>
    %9 = tpu.matmul %5, %8, %cst_6 {dimension_numbers = #tpu.dot_dimension_numbers<[1], [0], [0], [1], [0, 0, 1, 1], [], []>} : vector<32x16xf32>, vector<16x16xf32>, vector<32x16xf32> -> vector<32x16xf32>
    %10 = vector.extract_strided_slice %7 {offsets = [0, 0], sizes = [32, 8], strides = [1, 1]} : vector<32x16xf32> to vector<32x8xf32>
    %c0_7 = arith.constant 0 : index
    %c0_8 = arith.constant 0 : index
    %c0_9 = arith.constant 0 : index
    %c0_10 = arith.constant 0 : index
    %11 = vector.load %arg4[%c0_7, %c0_8, %c0_9, %c0_10] : memref<1x4x32x8xf32, #tpu.memory_space<vmem>>, vector<1x1x32x8xf32>
    %12 = vector.shape_cast %11 : vector<1x1x32x8xf32> to vector<32x8xf32>
    %13 = vector.shape_cast %10 : vector<32x8xf32> to vector<1x1x32x8xf32>
    tpu.vector_store %arg4[%c0_7, %c0_8, %c0_9, %c0_10], %13 {strides = array<i32>} : memref<1x4x32x8xf32, #tpu.memory_space<vmem>>, vector<1x1x32x8xf32>,
    %14 = vector.extract_strided_slice %7 {offsets = [0, 8], sizes = [32, 8], strides = [1, 1]} : vector<32x16xf32> to vector<32x8xf32>
    %c0_11 = arith.constant 0 : index
    %c1 = arith.constant 1 : index
    %c0_12 = arith.constant 0 : index
    %c0_13 = arith.constant 0 : index
    %15 = vector.load %arg4[%c0_11, %c1, %c0_12, %c0_13] : memref<1x4x32x8xf32, #tpu.memory_space<vmem>>, vector<1x1x32x8xf32>
    %16 = vector.shape_cast %15 : vector<1x1x32x8xf32> to vector<32x8xf32>
    %17 = vector.shape_cast %14 : vector<32x8xf32> to vector<1x1x32x8xf32>
    tpu.vector_store %arg4[%c0_11, %c1, %c0_12, %c0_13], %17 {strides = array<i32>} : memref<1x4x32x8xf32, #tpu.memory_space<vmem>>, vector<1x1x32x8xf32>,
    %18 = vector.extract_strided_slice %9 {offsets = [0, 0], sizes = [32, 8], strides = [1, 1]} : vector<32x16xf32> to vector<32x8xf32>
    %c0_14 = arith.constant 0 : index
    %c2 = arith.constant 2 : index
    %c0_15 = arith.constant 0 : index
    %c0_16 = arith.constant 0 : index
    %19 = vector.load %arg4[%c0_14, %c2, %c0_15, %c0_16] : memref<1x4x32x8xf32, #tpu.memory_space<vmem>>, vector<1x1x32x8xf32>
    %20 = vector.shape_cast %19 : vector<1x1x32x8xf32> to vector<32x8xf32>
    %21 = vector.shape_cast %18 : vector<32x8xf32> to vector<1x1x32x8xf32>
    tpu.vector_store %arg4[%c0_14, %c2, %c0_15, %c0_16], %21 {strides = array<i32>} : memref<1x4x32x8xf32, #tpu.memory_space<vmem>>, vector<1x1x32x8xf32>,
    %22 = vector.extract_strided_slice %9 {offsets = [0, 8], sizes = [32, 8], strides = [1, 1]} : vector<32x16xf32> to vector<32x8xf32>
    %c0_17 = arith.constant 0 : index
    %c3 = arith.constant 3 : index
    %c0_18 = arith.constant 0 : index
    %c0_19 = arith.constant 0 : index
    %23 = vector.load %arg4[%c0_17, %c3, %c0_18, %c0_19] : memref<1x4x32x8xf32, #tpu.memory_space<vmem>>, vector<1x1x32x8xf32>
    %24 = vector.shape_cast %23 : vector<1x1x32x8xf32> to vector<32x8xf32>
    %25 = vector.shape_cast %22 : vector<32x8xf32> to vector<1x1x32x8xf32>
    tpu.vector_store %arg4[%c0_17, %c3, %c0_18, %c0_19], %25 {strides = array<i32>} : memref<1x4x32x8xf32, #tpu.memory_space<vmem>>, vector<1x1x32x8xf32>,
    return
  }
  func.func @transform_0(%arg0: i32, %arg1: i32) -> (i32, i32, i32) {
    %c0_i32 = arith.constant 0 : i32
    %c0_i32_0 = arith.constant 0 : i32
    return %arg0, %arg1, %c0_i32 : i32, i32, i32
  }
  func.func @transform_1(%arg0: i32, %arg1: i32) -> (i32, i32) {
    %c0_i32 = arith.constant 0 : i32
    %c0_i32_0 = arith.constant 0 : i32
    %c0_i32_1 = arith.constant 0 : i32
    return %c0_i32, %c0_i32_0 : i32, i32
  }
  func.func @transform_2(%arg0: i32, %arg1: i32) -> (i32, i32, i32, i32) {
    %c0_i32 = arith.constant 0 : i32
    %c0_i32_0 = arith.constant 0 : i32
    %c0_i32_1 = arith.constant 0 : i32
    return %arg0, %c0_i32, %arg1, %c0_i32_0 : i32, i32, i32, i32
  }
}

</mosaic_0001>

<llo_original>
// kernel: tpu_custom_call.1
$region0: #{tpu_custom_call.1}
  #allocation0 [shape = 'u32[]', space=smem, size = 0x4, offset = 0x4, fixed_abs, tag = 'smem constant byte address 0x4 - core index']
  #allocation1 [shape = 'u32[144,128]{1,0:T(1,128)}', space=vmem, size = 0x12000, scoped, tag = 'internal scratch']
  %s0 = inlined_call_operand.hbm [shape: f32[2,32,32], index: 0, kind: input, shape index: {}]
  %s1 = inlined_call_operand.hbm [shape: f32[16,16], index: 1, kind: input, shape index: {}]
  %s2 = inlined_call_operand.vmem [shape: f32[2,4,32,8], index: 2, kind: output, shape index: {}]
  %s3 = sld [smem:[#allocation0]]
  $region49: #{tpu_custom_call.1} parent=0
    _
  %s5 = ssub.s32 1, %s3
  %s6 = scalar_select 0, %s5, %s3
  $region1: #{tpu_custom_call.1} parent=0
    #allocation2 [shape = 'u8[32768]{0}', space=vmem, size = 0x8000, scoped, tag = 'input window, operand 0']
    #allocation3 [shape = 's32[2]{0}', space=sflag, size = 0x8, scoped, tag = 'scoped memory for tpu_custom_call.1']
    #allocation4 [shape = 'u8[8192]{0}', space=vmem, size = 0x2000, scoped, tag = 'input window, operand 1, single buffered']
    #allocation5 [shape = 's32[1]{0}', space=sflag, size = 0x4, scoped, tag = 'scoped memory for tpu_custom_call.1']
    %7 = vsyncpa [#allocation3], 0
    %s8 = scalar_lea.sflag [#allocation3], 1
    %9 = vsyncpa %s8, 0
    %10 = vsyncpa [#allocation5], 0
    loop: start=0, step=1, limit=4
    $region2: #{tpu_custom_call.1} parent=1 // loop_pre_header
      _
    $region3: #{tpu_custom_call.1} parent=1 // loop_header
      %s12 = sphi 0, %s16
      %p13 = scmp.ge.s32.totalorder %s12, 4
      %s19 = sphi 0, %s31
      %s20 = sphi 0, %s27
      %s21 = sphi 0, %s19
      %s22 = sphi 0, %s20
      %s23 = sphi 0, %s21
      %s24 = sphi 0, %s22
      %s36 = sphi 0, %s38
      %s39 = sphi 0, %s36
      %s40 = sphi 0, %s39
      %s56 = sphi 0, %s40
      %s60 = sphi 0, %s60
      %s62 = sphi 0, %s60
      %s63 = sphi 0, %s62
      %s77 = sphi 0, %s63
      %s85 = sphi 0, %s87
      %s88 = sphi 0, %s85
      %s89 = sphi 0, %s88
      %s105 = sphi 0, %s89
    $region4: #{tpu_custom_call.1} parent=1 // loop_header_branch
      %15 = sbr.rel (%p13) target = $region8
    $region5: #{tpu_custom_call.1} parent=1 // loop_body
      %s17 = ssub.s32 %s12, 1
      %s18 = ssub.s32 %s12, 2
      %s25 = sadd.s32 1, %s20
      %p26 = scmp.ge.s32.totalorder %s25, 1
      %s27 = scalar_select %p26, 0, %s25
      %s28 = sadd.s32 1, %s19
      %s29 = scalar_select %p26, %s28, %s19
      %p30 = scmp.ge.s32.totalorder %s29, 2
      %s31 = scalar_select %p30, 0, %s29
      %s32 = ssub.s32 %s19, %s31
      %s33 = ssub.s32 %s20, %s27
      %s34 = sor.u32 %s32, %s33
      %p35 = scmp.eq.s32.totalorder %s34, 0
      %s37 = sadd.s32 %s36, 1
      %s38 = scalar_select %p35, %s36, %s37
      %p41 = pneg %p35
      %p42 = scmp.eq.s32.totalorder %s12, 1
      %p43 = por %p41, %p42
      %p44 = scmp.ne.s32.totalorder %s36, %s39
      %p45 = scmp.eq.s32.totalorder %s12, 0
      %p46 = por %p44, %p45
      %p47 = scmp.ne.s32.totalorder %s36, %s39
      %p48 = scmp.eq.s32.totalorder %s17, 1
      %p49 = por %p47, %p48
      %p50 = scmp.ne.s32.totalorder %s39, %s40
      %p51 = scmp.eq.s32.totalorder %s17, 0
      %p52 = por %p50, %p51
      %p53 = scmp.ne.s32.totalorder %s39, %s40
      %p54 = scmp.eq.s32.totalorder %s18, 1
      %p55 = por %p53, %p54
      %p57 = scmp.ne.s32.totalorder %s40, %s56
      %p58 = scmp.eq.s32.totalorder %s18, 0
      %p59 = por %p57, %p58
      %s61 = sadd.s32 %s60, 1
      %p64 = scmp.eq.s32.totalorder %s12, 1
      %p65 = scmp.ne.s32.totalorder %s60, %s62
      %p66 = scmp.eq.s32.totalorder %s12, 0
      %p67 = por %p65, %p66
      %p68 = scmp.ne.s32.totalorder %s60, %s62
      %p69 = scmp.eq.s32.totalorder %s17, 1
      %p70 = por %p68, %p69
      %p71 = scmp.ne.s32.totalorder %s62, %s63
      %p72 = scmp.eq.s32.totalorder %s17, 0
      %p73 = por %p71, %p72
      %p74 = scmp.ne.s32.totalorder %s62, %s63
      %p75 = scmp.eq.s32.totalorder %s18, 1
      %p76 = por %p74, %p75
      %p78 = scmp.ne.s32.totalorder %s63, %s77
      %p79 = scmp.eq.s32.totalorder %s18, 0
      %p80 = por %p78, %p79
      %s81 = ssub.s32 %s19, %s31
      %s82 = ssub.s32 %s20, %s27
      %s83 = sor.u32 %s81, %s82
      %p84 = scmp.eq.s32.totalorder %s83, 0
      %s86 = sadd.s32 %s85, 1
      %s87 = scalar_select %p84, %s85, %s86
      %p90 = pneg %p84
      %p91 = scmp.eq.s32.totalorder %s12, 1
      %p92 = por %p90, %p91
      %p93 = scmp.ne.s32.totalorder %s85, %s88
      %p94 = scmp.eq.s32.totalorder %s12, 0
      %p95 = por %p93, %p94
      %p96 = scmp.ne.s32.totalorder %s85, %s88
      %p97 = scmp.eq.s32.totalorder %s17, 1
      %p98 = por %p96, %p97
      %p99 = scmp.ne.s32.totalorder %s88, %s89
      %p100 = scmp.eq.s32.totalorder %s17, 0
      %p101 = por %p99, %p100
      %p102 = scmp.ne.s32.totalorder %s88, %s89
      %p103 = scmp.eq.s32.totalorder %s18, 1
      %p104 = por %p102, %p103
      %p106 = scmp.ne.s32.totalorder %s89, %s105
      %p107 = scmp.eq.s32.totalorder %s18, 0
      %p108 = por %p106, %p107
      %p109 = scmp.le.s32.totalorder 1, %s12
      %p110 = scmp.lt.s32.totalorder %s12, 3
      %p111 = pnand %p109, %p110
      %p112 = pneg %p111
      // Predicated region
      $region9: #{tpu_custom_call.1} parent=5 // pred_check
        _
      $region10: #{tpu_custom_call.1} parent=5 // pred_check_branch
        %114 = sbr.rel (%p111) target = $region12
      $region11: #{tpu_custom_call.1} parent=5 // pred_region
        %s115 = ssub.s32 %s12, 1
        // Predicated region
        $region13: #{tpu_custom_call.1} parent=11 // pred_check
          %p116 = pneg %p73
        $region14: #{tpu_custom_call.1} parent=11 // pred_check_branch
          %118 = sbr.rel (%p116) target = $region16
        $region15: #{tpu_custom_call.1} parent=11 // pred_region
          %s120 = ssub.s32 256, 256
          %121 = vsyncadd [#allocation5], %s120
          %s122 = sshll.u32 [#allocation4], 4
          %s123 = int_to_ptr.vmem [resolvable:$true] %s122
          %128 = dma.hbm_to_vmem [thread:$0]  %s1, 256, %s123, [#allocation5], 128, 128, 8
        $region16: #{tpu_custom_call.1} parent=11 // pred_fallthru
          _
      $region12: #{tpu_custom_call.1} parent=5 // pred_fallthru
        _
      %p129 = scmp.lt.s32.totalorder %s12, 2
      // Predicated region
      $region17: #{tpu_custom_call.1} parent=5 // pred_check
        %p130 = pneg %p129
      $region18: #{tpu_custom_call.1} parent=5 // pred_check_branch
        %132 = sbr.rel (%p130) target = $region20
      $region19: #{tpu_custom_call.1} parent=5 // pred_region
        // Predicated region
        $region21: #{tpu_custom_call.1} parent=19 // pred_check
          %p133 = pneg %p46
        $region22: #{tpu_custom_call.1} parent=19 // pred_check_branch
          %135 = sbr.rel (%p133) target = $region24
        $region23: #{tpu_custom_call.1} parent=19 // pred_region
          %s136 = sand.u32 %s36, 1
          %s137 = scalar_lea.sflag [#allocation3], %s136
          %s138 = sand.u32 %s36, 1
          %s139 = smul.addr %s138, 32
          %s140 = scalar_lea.vmem [#allocation2], %s139
          %s141 = smul.u32 4, %s20
          %s143 = ssub.s32 512, 512
          %144 = vsyncadd %s137, %s143
          %s145 = smul.addr %s19, 4
          %s146 = sadd.s32 %s141, %s145
          %s147 = smul.addr %s146, 128
          %s148 = scalar_lea.hbm %s0, %s147
          %s149 = sshll.u32 %s140, 4
          %s150 = int_to_ptr.vmem [resolvable:$true] %s149
          %155 = dma.hbm_to_vmem [thread:$0]  %s148, 512, %s150, %s137, 128, 128, 8
        $region24: #{tpu_custom_call.1} parent=19 // pred_fallthru
          _
      $region20: #{tpu_custom_call.1} parent=5 // pred_fallthru
        _
      %p156 = scmp.le.s32.totalorder 1, %s12
      %p157 = scmp.lt.s32.totalorder %s12, 3
      %p158 = pnand %p156, %p157
      %p159 = pneg %p158
      // Predicated region
      $region25: #{tpu_custom_call.1} parent=5 // pred_check
        _
      $region26: #{tpu_custom_call.1} parent=5 // pred_check_branch
        %161 = sbr.rel (%p158) target = $region28
      $region27: #{tpu_custom_call.1} parent=5 // pred_region
        %s162 = ssub.s32 %s12, 1
        %s163 = sand.u32 %s39, 1
        %s164 = scalar_lea.sflag [#allocation3], %s163
        %s165 = sand.u32 %s39, 1
        %s166 = smul.addr %s165, 32
        %s167 = scalar_lea.vmem [#allocation2], %s166
        // Predicated region
        $region29: #{tpu_custom_call.1} parent=27 // pred_check
          %p168 = pneg %p52
        $region30: #{tpu_custom_call.1} parent=27 // pred_check_branch
          %170 = sbr.rel (%p168) target = $region32
        $region31: #{tpu_custom_call.1} parent=27 // pred_region
          %171 = dma.done %s164, 512
        $region32: #{tpu_custom_call.1} parent=27 // pred_fallthru
          _
        // Predicated region
        $region33: #{tpu_custom_call.1} parent=27 // pred_check
          %p172 = pneg %p73
        $region34: #{tpu_custom_call.1} parent=27 // pred_check_branch
          %174 = sbr.rel (%p172) target = $region36
        $region35: #{tpu_custom_call.1} parent=27 // pred_region
          %175 = dma.done [#allocation5], 256
        $region36: #{tpu_custom_call.1} parent=27 // pred_fallthru
          _
        %s176 = sand.u32 %s39, 1
        %s177 = scalar_lea.sflag [#allocation3], %s176
        %s178 = sand.u32 %s39, 1
        %s179 = smul.addr %s178, 32
        %s180 = scalar_lea.vmem [#allocation2], %s179
        %p181 = pneg %p52
        %p182 = pneg %p49
        %p183 = pneg %p73
        %p184 = pneg %p70
        %p185 = pneg %p101
        %p186 = pneg %p98
        %s187 = smul.u32 4, %s22
        %p188 = scmp.lt.s32.totalorder %s21, 1
        %s189 = scalar_select %p188, %s21, 1
        %p190 = scmp.lt.s32.totalorder %s187, 3
        %s191 = scalar_select %p190, %s187, 3
        %s192 = smul.addr %s189, 16
        %s193 = sadd.s32 %s191, %s192
        %s194 = smul.addr %s193, 8
        %s195 = scalar_lea.vmem %s2, %s194
        %s196 = smul.u32 4, %s22
        %s197 = smul.u32 4, %s22
        %p198 = scmp.lt.s32.totalorder %s21, 1
        %s199 = scalar_select %p198, %s21, 1
        %p200 = scmp.lt.s32.totalorder %s197, 3
        %s201 = scalar_select %p200, %s197, 3
        %s202 = smul.addr %s199, 16
        %s203 = sadd.s32 %s201, %s202
        %s204 = smul.addr %s203, 8
        %s205 = scalar_lea.vmem %s2, %s204
        %s206 = smul.u32 4, %s22
        %v207 = vld [vmem:[%s167] sm:$0xff]
        %v208 = vld [vmem:[%s167 + $0x8] sm:$0xff]
        %v209 = vld [vmem:[%s167 + $0x10] sm:$0xff]
        %v210 = vld [vmem:[%s167 + $0x18] sm:$0xff]
        %215 = vrot.lane.b32.xlu0 %v207, 112
        %v216 = vpop.permute.xlu0 %215
        %217 = vrot.lane.b32.xlu0 %v208, 112
        %v218 = vpop.permute.xlu0 %217
        %219 = vrot.lane.b32.xlu0 %v209, 112
        %v220 = vpop.permute.xlu0 %219
        %221 = vrot.lane.b32.xlu0 %v210, 112
        %v222 = vpop.permute.xlu0 %221
        %v227 = vadd.f32 %v207, %v216
        %v228 = vadd.f32 %v208, %v218
        %v229 = vadd.f32 %v209, %v220
        %v230 = vadd.f32 %v210, %v222
        %v231 = vsub.f32 %v207, %v216
        %v232 = vsub.f32 %v208, %v218
        %v233 = vsub.f32 %v209, %v220
        %v234 = vsub.f32 %v210, %v222
        %v235 = vld [vmem:[#allocation4] sm:$0xff]
        %v236 = vld [vmem:[#allocation4 + $0x8] sm:$0xff]
        %vm237 = vcmask 130048
        %v239 = vsel %vm237, %v227, 0
        %v242 = vsel %vm237, %v228, 0
        %v245 = vsel %vm237, %v229, 0
        %v248 = vsel %vm237, %v230, 0
        %250 = vmatprep.subr.mxu0 0.0
        %251 = vmatpush1.msra.mxu0 %v235
        %252 = vmatprep.subr.mxu0 0.0
        %253 = vmatpush1.msra.mxu0 %v236
        %254 = vmatprep.subr.mxu0 0.0
        %255 = vmatpush1.msra.mxu0 0.0
        %256 = vmatprep.subr.mxu0 0.0
        %257 = vmatpush1.msra.mxu0 0.0
        %258 = vmatprep.subr.mxu0 0.0
        %259 = vmatpush1.msra.mxu0 0.0
        %260 = vmatprep.subr.mxu0 0.0
        %261 = vmatpush1.msra.mxu0 0.0
        %262 = vmatprep.subr.mxu0 0.0
        %263 = vmatpush1.msra.mxu0 0.0
        %264 = vmatprep.subr.mxu0 0.0
        %265 = vmatpush1.msra.mxu0 0.0
        %266 = vmatprep.subr.mxu0 0.0
        %267 = vmatpush1.msra.mxu0 0.0
        %268 = vmatprep.subr.mxu0 0.0
        %269 = vmatpush1.msra.mxu0 0.0
        %270 = vmatprep.subr.mxu0 0.0
        %271 = vmatpush1.msra.mxu0 0.0
        %272 = vmatprep.subr.mxu0 0.0
        %273 = vmatpush1.msra.mxu0 0.0
        %274 = vmatprep.subr.mxu0 0.0
        %275 = vmatpush1.msra.mxu0 0.0
        %276 = vmatprep.subr.mxu0 0.0
        %277 = vmatpush1.msra.mxu0 0.0
        %278 = vmatprep.subr.mxu0 0.0
        %279 = vmatpush1.msra.mxu0 0.0
        %280 = vmatprep.subr.mxu0 0.0
        %281 = vmatpush1.msra.mxu0 0.0
        %282 = vmatprep.subr.mxu0 0.0
        %283 = vmatpush1.msra.mxu0 0.0
        %284 = vmatprep.subr.mxu0 0.0
        %285 = vmatpush1.msra.mxu0 0.0
        %286 = vmatprep.subr.mxu0 0.0
        %287 = vmatpush1.msra.mxu0 0.0
        %288 = vmatprep.subr.mxu0 0.0
        %289 = vmatpush1.msra.mxu0 0.0
        %290 = vmatprep.subr.mxu0 0.0
        %291 = vmatpush1.msra.mxu0 0.0
        %292 = vmatprep.subr.mxu0 0.0
        %293 = vmatpush1.msra.mxu0 0.0
        %294 = vmatprep.subr.mxu0 0.0
        %295 = vmatpush1.msra.mxu0 0.0
        %296 = vmatprep.subr.mxu0 0.0
        %297 = vmatpush1.msra.mxu0 0.0
        %298 = vmatprep.subr.mxu0 0.0
        %299 = vmatpush1.msra.mxu0 0.0
        %300 = vmatprep.subr.mxu0 0.0
        %301 = vmatpush1.msra.mxu0 0.0
        %302 = vmatprep.subr.mxu0 0.0
        %303 = vmatpush1.msra.mxu0 0.0
        %304 = vmatprep.subr.mxu0 0.0
        %305 = vmatpush1.msra.mxu0 0.0
        %306 = vmatprep.subr.mxu0 0.0
        %307 = vmatpush1.msra.mxu0 0.0
        %308 = vmatprep.subr.mxu0 0.0
        %309 = vmatpush1.msra.mxu0 0.0
        %310 = vmatprep.subr.mxu0 0.0
        %311 = vmatpush1.msra.mxu0 0.0
        %312 = vmatprep.subr.mxu0 0.0
        %313 = vmatpush1.msra.mxu0 0.0
        %314 = vmatprep.mubr.f32.mxu0 0.0
        %315 = vmatmul.mubr.f32.gmra.mrb[0].mxu0 %v239
        %v316 = vpop.f32.mrb[0].mxu0
        %v317 = vadd.f32 0.0, %v316
        %v318 = vpop.f32.mrb[0].mxu0
        %319 = vmatprep.mubr.f32.mxu0 0.0
        %320 = vmatmul.mubr.f32.gmra.mrb[0].mxu0 %v242
        %v321 = vpop.f32.mrb[0].mxu0
        %v322 = vadd.f32 0.0, %v321
        %v323 = vpop.f32.mrb[0].mxu0
        %324 = vmatprep.mubr.f32.mxu0 0.0
        %325 = vmatmul.mubr.f32.gmra.mrb[0].mxu0 %v245
        %v326 = vpop.f32.mrb[0].mxu0
        %v327 = vadd.f32 0.0, %v326
        %v328 = vpop.f32.mrb[0].mxu0
        %329 = vmatprep.mubr.f32.mxu0 0.0
        %330 = vmatmul.mubr.f32.gmra.mrb[0].mxu0 %v248
        %v331 = vpop.f32.mrb[0].mxu0
        %v332 = vadd.f32 0.0, %v331
        %v333 = vpop.f32.mrb[0].mxu0
        %334 = vdwg.mxu0
        %v336 = vsel %vm237, %v231, 0
        %v339 = vsel %vm237, %v232, 0
        %v342 = vsel %vm237, %v233, 0
        %v345 = vsel %vm237, %v234, 0
        %347 = vmatprep.subr.mxu0 0.0
        %348 = vmatpush1.msra.mxu0 %v235
        %349 = vmatprep.subr.mxu0 0.0
        %350 = vmatpush1.msra.mxu0 %v236
        %351 = vmatprep.subr.mxu0 0.0
        %352 = vmatpush1.msra.mxu0 0.0
        %353 = vmatprep.subr.mxu0 0.0
        %354 = vmatpush1.msra.mxu0 0.0
        %355 = vmatprep.subr.mxu0 0.0
        %356 = vmatpush1.msra.mxu0 0.0
        %357 = vmatprep.subr.mxu0 0.0
        %358 = vmatpush1.msra.mxu0 0.0
        %359 = vmatprep.subr.mxu0 0.0
        %360 = vmatpush1.msra.mxu0 0.0
        %361 = vmatprep.subr.mxu0 0.0
        %362 = vmatpush1.msra.mxu0 0.0
        %363 = vmatprep.subr.mxu0 0.0
        %364 = vmatpush1.msra.mxu0 0.0
        %365 = vmatprep.subr.mxu0 0.0
        %366 = vmatpush1.msra.mxu0 0.0
        %367 = vmatprep.subr.mxu0 0.0
        %368 = vmatpush1.msra.mxu0 0.0
        %369 = vmatprep.subr.mxu0 0.0
        %370 = vmatpush1.msra.mxu0 0.0
        %371 = vmatprep.subr.mxu0 0.0
        %372 = vmatpush1.msra.mxu0 0.0
        %373 = vmatprep.subr.mxu0 0.0
        %374 = vmatpush1.msra.mxu0 0.0
        %375 = vmatprep.subr.mxu0 0.0
        %376 = vmatpush1.msra.mxu0 0.0
        %377 = vmatprep.subr.mxu0 0.0
        %378 = vmatpush1.msra.mxu0 0.0
        %379 = vmatprep.subr.mxu0 0.0
        %380 = vmatpush1.msra.mxu0 0.0
        %381 = vmatprep.subr.mxu0 0.0
        %382 = vmatpush1.msra.mxu0 0.0
        %383 = vmatprep.subr.mxu0 0.0
        %384 = vmatpush1.msra.mxu0 0.0
        %385 = vmatprep.subr.mxu0 0.0
        %386 = vmatpush1.msra.mxu0 0.0
        %387 = vmatprep.subr.mxu0 0.0
        %388 = vmatpush1.msra.mxu0 0.0
        %389 = vmatprep.subr.mxu0 0.0
        %390 = vmatpush1.msra.mxu0 0.0
        %391 = vmatprep.subr.mxu0 0.0
        %392 = vmatpush1.msra.mxu0 0.0
        %393 = vmatprep.subr.mxu0 0.0
        %394 = vmatpush1.msra.mxu0 0.0
        %395 = vmatprep.subr.mxu0 0.0
        %396 = vmatpush1.msra.mxu0 0.0
        %397 = vmatprep.subr.mxu0 0.0
        %398 = vmatpush1.msra.mxu0 0.0
        %399 = vmatprep.subr.mxu0 0.0
        %400 = vmatpush1.msra.mxu0 0.0
        %401 = vmatprep.subr.mxu0 0.0
        %402 = vmatpush1.msra.mxu0 0.0
        %403 = vmatprep.subr.mxu0 0.0
        %404 = vmatpush1.msra.mxu0 0.0
        %405 = vmatprep.subr.mxu0 0.0
        %406 = vmatpush1.msra.mxu0 0.0
        %407 = vmatprep.subr.mxu0 0.0
        %408 = vmatpush1.msra.mxu0 0.0
        %409 = vmatprep.subr.mxu0 0.0
        %410 = vmatpush1.msra.mxu0 0.0
        %411 = vmatprep.mubr.f32.mxu0 0.0
        %412 = vmatmul.mubr.f32.gmra.mrb[0].mxu0 %v336
        %v413 = vpop.f32.mrb[0].mxu0
        %v414 = vadd.f32 0.0, %v413
        %v415 = vpop.f32.mrb[0].mxu0
        %416 = vmatprep.mubr.f32.mxu0 0.0
        %417 = vmatmul.mubr.f32.gmra.mrb[0].mxu0 %v339
        %v418 = vpop.f32.mrb[0].mxu0
        %v419 = vadd.f32 0.0, %v418
        %v420 = vpop.f32.mrb[0].mxu0
        %421 = vmatprep.mubr.f32.mxu0 0.0
        %422 = vmatmul.mubr.f32.gmra.mrb[0].mxu0 %v342
        %v423 = vpop.f32.mrb[0].mxu0
        %v424 = vadd.f32 0.0, %v423
        %v425 = vpop.f32.mrb[0].mxu0
        %426 = vmatprep.mubr.f32.mxu0 0.0
        %427 = vmatmul.mubr.f32.gmra.mrb[0].mxu0 %v345
        %v428 = vpop.f32.mrb[0].mxu0
        %v429 = vadd.f32 0.0, %v428
        %v430 = vpop.f32.mrb[0].mxu0
        %431 = vdwg.mxu0
        %vm432 = vcmask 64512
        %433 = vst.msk [vmem:[%s205] sm:$0xff] %vm432, %v317
        %434 = vst.msk [vmem:[%s205 + $0x8] sm:$0xff] %vm432, %v322
        %435 = vst.msk [vmem:[%s205 + $0x10] sm:$0xff] %vm432, %v327
        %436 = vst.msk [vmem:[%s205 + $0x18] sm:$0xff] %vm432, %v332
        %441 = vrot.lane.b32.xlu0 %v317, 120
        %v442 = vpop.permute.xlu0 %441
        %443 = vrot.lane.b32.xlu0 %v322, 120
        %v444 = vpop.permute.xlu0 %443
        %445 = vrot.lane.b32.xlu0 %v327, 120
        %v446 = vpop.permute.xlu0 %445
        %447 = vrot.lane.b32.xlu0 %v332, 120
        %v448 = vpop.permute.xlu0 %447
        %s453 = scalar_lea.vmem %s205, 32
        %454 = vst.msk [vmem:[%s453] sm:$0xff] %vm432, %v442
        %455 = vst.msk [vmem:[%s453 + $0x8] sm:$0xff] %vm432, %v444
        %456 = vst.msk [vmem:[%s453 + $0x10] sm:$0xff] %vm432, %v446
        %457 = vst.msk [vmem:[%s453 + $0x18] sm:$0xff] %vm432, %v448
        %s458 = scalar_lea.vmem %s205, 64
        %459 = vst.msk [vmem:[%s458] sm:$0xff] %vm432, %v414
        %460 = vst.msk [vmem:[%s458 + $0x8] sm:$0xff] %vm432, %v419
        %461 = vst.msk [vmem:[%s458 + $0x10] sm:$0xff] %vm432, %v424
        %462 = vst.msk [vmem:[%s458 + $0x18] sm:$0xff] %vm432, %v429
        %467 = vrot.lane.b32.xlu0 %v414, 120
        %v468 = vpop.permute.xlu0 %467
        %469 = vrot.lane.b32.xlu0 %v419, 120
        %v470 = vpop.permute.xlu0 %469
        %471 = vrot.lane.b32.xlu0 %v424, 120
        %v472 = vpop.permute.xlu0 %471
        %473 = vrot.lane.b32.xlu0 %v429, 120
        %v474 = vpop.permute.xlu0 %473
        %s479 = scalar_lea.vmem %s205, 96
        %480 = vst.msk [vmem:[%s479] sm:$0xff] %vm432, %v468
        %481 = vst.msk [vmem:[%s479 + $0x8] sm:$0xff] %vm432, %v470
        %482 = vst.msk [vmem:[%s479 + $0x10] sm:$0xff] %vm432, %v472
        %483 = vst.msk [vmem:[%s479 + $0x18] sm:$0xff] %vm432, %v474
        %s484 = smul.u32 4, %s22
        %p485 = scmp.lt.s32.totalorder %s21, 1
        %s486 = scalar_select %p485, %s21, 1
        %p487 = scmp.lt.s32.totalorder %s484, 3
        %s488 = scalar_select %p487, %s484, 3
        %s489 = smul.addr %s486, 16
        %s490 = sadd.s32 %s488, %s489
        %s491 = smul.addr %s490, 8
        %s492 = scalar_lea.vmem %s2, %s491
        // Predicated region
        $region37: #{tpu_custom_call.1} parent=27 // pred_check
          %p493 = pneg %p98
        $region38: #{tpu_custom_call.1} parent=27 // pred_check_branch
          %495 = sbr.rel (%p493) target = $region40
        $region39: #{tpu_custom_call.1} parent=27 // pred_region
          %s496 = smul.u32 4, %s22
        $region40: #{tpu_custom_call.1} parent=27 // pred_fallthru
          _
      $region28: #{tpu_custom_call.1} parent=5 // pred_fallthru
        _
      %p497 = scmp.le.s32.totalorder 2, %s12
      // Predicated region
      $region41: #{tpu_custom_call.1} parent=5 // pred_check
        %p498 = pneg %p497
      $region42: #{tpu_custom_call.1} parent=5 // pred_check_branch
        %500 = sbr.rel (%p498) target = $region44
      $region43: #{tpu_custom_call.1} parent=5 // pred_region
        %s501 = ssub.s32 %s12, 2
        // Predicated region
        $region45: #{tpu_custom_call.1} parent=43 // pred_check
          %p502 = pneg %p104
        $region46: #{tpu_custom_call.1} parent=43 // pred_check_branch
          %504 = sbr.rel (%p502) target = $region48
        $region47: #{tpu_custom_call.1} parent=43 // pred_region
          %s505 = smul.u32 4, %s24
          %p506 = scmp.lt.s32.totalorder %s23, 1
          %s507 = scalar_select %p506, %s23, 1
          %p508 = scmp.lt.s32.totalorder %s505, 3
          %s509 = scalar_select %p508, %s505, 3
          %s510 = smul.addr %s507, 16
          %s511 = sadd.s32 %s509, %s510
          %s512 = smul.addr %s511, 8
          %s513 = scalar_lea.vmem %s2, %s512
        $region48: #{tpu_custom_call.1} parent=43 // pred_fallthru
          _
      $region44: #{tpu_custom_call.1} parent=5 // pred_fallthru
        _
    $region6: #{tpu_custom_call.1} parent=1 // loop_footer
      %s16 = sadd.s32 1, %s12
    $region7: #{tpu_custom_call.1} parent=1 // loop_footer_branch
      %11 = sbr.rel target = $region3
    $region8: #{tpu_custom_call.1} parent=1 // loop_exit
      _
    %514 = vsyncpa [#allocation3], 1
    %s515 = scalar_lea.sflag [#allocation3], 1
    %516 = vsyncpa %s515, 1
    %517 = vsyncpa [#allocation5], 1

</llo_original>
